<compile_context>
chip_gen: v6e
topology: v6e:2x2x1
jax: 0.10.0
libtpu: 0.0.40
codegen_flags: <defaults>
</compile_context>

<pallas_src>
import jax
import jax.numpy as jnp
from jax.experimental import pallas as pl
from jax.experimental.pallas import tpu as pltpu

H1, H2 = 512, 256
BN_EPS = 1e-5
BATCH_TILE_MAX = 512  # rows per grid step (multiple of 8)


def _round_up(x, m):
    return (x + m - 1) // m * m


def _cdiv(a, b):
    return (a + b - 1) // b


def policy_kernel(x_ref, scale_ref, shift_ref,
                  w1_ref, b1_ref, w2_ref, b2_ref, w3_ref, b3_ref,
                  o_ref):
    # --- BatchNorm folded to per-feature affine (stats computed outside the kernel) ---
    x = x_ref[...]                                   # (bt, S) f32
    x_bn = x * scale_ref[...] + shift_ref[...]       # f32 VPU work, hidden under MXU

    # --- fc1 + ReLU (bf16 MXU inputs, f32 accumulate) ---
    h1 = jnp.dot(x_bn.astype(jnp.bfloat16), w1_ref[...],
                 preferred_element_type=jnp.float32) + b1_ref[...]
    h1 = jnp.maximum(h1, 0.0)

    # --- fc2 + ReLU ---
    h2 = jnp.dot(h1.astype(jnp.bfloat16), w2_ref[...],
                 preferred_element_type=jnp.float32) + b2_ref[...]
    h2 = jnp.maximum(h2, 0.0)

    # --- fc3 + tanh (output lanes padded to a multiple of 128; sliced outside) ---
    out = jnp.dot(h2.astype(jnp.bfloat16), w3_ref[...],
                  preferred_element_type=jnp.float32) + b3_ref[...]
    o_ref[...] = jnp.tanh(out)


@jax.jit
def policy_forward(states, params):
    """states: (B, state_size) float32 -> (B, action_size) float32."""
    gamma, beta, w1, b1, w2, b2, w3, b3 = params
    B, S = states.shape
    A = w3.shape[1]

    # --- BatchNorm1d training-mode stats over the full batch, folded to scale/shift ---
    mean = jnp.mean(states, axis=0, keepdims=True)
    var = jnp.mean((states - mean) ** 2, axis=0, keepdims=True)   # biased variance
    scale = gamma * jax.lax.rsqrt(var + BN_EPS)                   # (1, S)
    shift = beta - mean * scale                                   # (1, S)

    # --- pick batch tile: >=2 tiles when B > 8 (megacore), <= BATCH_TILE_MAX rows ---
    n_target = 2 if B > 8 else 1
    bt = min(BATCH_TILE_MAX, _round_up(_cdiv(B, n_target), 8))
    B_pad = _round_up(B, bt)
    A_pad = _round_up(A, 128)

    x = states
    if B_pad != B:
        x = jnp.pad(x, ((0, B_pad - B), (0, 0)))
    w3_p = jnp.pad(w3, ((0, 0), (0, A_pad - A))) if A_pad != A else w3
    b3_p = jnp.pad(b3, ((0, 0), (0, A_pad - A))) if A_pad != A else b3

    # bf16 weights for the MXU; biases / affine stay f32.
    w1_b = w1.astype(jnp.bfloat16)
    w2_b = w2.astype(jnp.bfloat16)
    w3_b = w3_p.astype(jnp.bfloat16)

    grid = (B_pad // bt,)

    def const(shape):
        # Weight / bias / affine blocks: full array, constant index_map -> DMA'd once,
        # resident in VMEM across all batch tiles.
        return pl.BlockSpec(shape, lambda i: (0, 0))

    out_pad = pl.pallas_call(
        policy_kernel,
        out_shape=jax.ShapeDtypeStruct((B_pad, A_pad), jnp.float32),
        grid=grid,
        in_specs=[
            pl.BlockSpec((bt, S), lambda i: (i, 0)),   # x (tiled over batch)
            const((1, S)),                             # scale
            const((1, S)),                             # shift
            const((S, H1)),                            # w1 (bf16)
            const((1, H1)),                            # b1
            const((H1, H2)),                           # w2 (bf16)
            const((1, H2)),                            # b2
            const((H2, A_pad)),                        # w3 (bf16, lane-padded)
            const((1, A_pad)),                         # b3 (lane-padded)
        ],
        out_specs=pl.BlockSpec((bt, A_pad), lambda i: (i, 0)),
        compiler_params=pltpu.CompilerParams(
            dimension_semantics=("parallel",),         # v7x: split batch tiles across 2 TCs
            vmem_limit_bytes=32 * 1024 * 1024,
        ),
    )(x, scale, shift, w1_b, b1, w2_b, b2, w3_b, b3_p)

    return out_pad[:B, :A]


def init_params(key, state_size, action_size):
    """Deterministic init mirroring PolicyNetwork.__init__ / reset_parameters.

    PyTorch stores Linear weights as (out, in); we store (in, out) for x @ W.
    reset_parameters uses limit = 1/sqrt(out_features) for fc1/fc2 weights,
    +-0.003 for fc3 weights; biases keep the default Linear init of
    +-1/sqrt(in_features).
    """
    ks = jax.random.split(key, 6)

    def uni(k, shape, lim):
        return jax.random.uniform(k, shape, jnp.float32, -lim, lim)

    gamma = jnp.ones((1, state_size), jnp.float32)
    beta = jnp.zeros((1, state_size), jnp.float32)

    w1 = uni(ks[0], (state_size, H1), 1.0 / jnp.sqrt(float(H1)))
    b1 = uni(ks[1], (1, H1), 1.0 / jnp.sqrt(float(state_size)))
    w2 = uni(ks[2], (H1, H2), 1.0 / jnp.sqrt(float(H2)))
    b2 = uni(ks[3], (1, H2), 1.0 / jnp.sqrt(float(H1)))
    w3 = uni(ks[4], (H2, action_size), 0.003)
    b3 = uni(ks[5], (1, action_size), 1.0 / jnp.sqrt(float(H2)))

    return (gamma, beta, w1, b1, w2, b2, w3, b3)


def reference_forward(states, params):
    """Pure-JAX reference with the same numerics (bf16 matmul inputs, f32 accumulate)."""
    gamma, beta, w1, b1, w2, b2, w3, b3 = params
    mean = jnp.mean(states, axis=0, keepdims=True)
    var = jnp.mean((states - mean) ** 2, axis=0, keepdims=True)
    scale = gamma * jax.lax.rsqrt(var + BN_EPS)
    shift = beta - mean * scale
    x = states * scale + shift
    h1 = jnp.maximum(
        jnp.dot(x.astype(jnp.bfloat16), w1.astype(jnp.bfloat16),
                preferred_element_type=jnp.float32) + b1, 0.0)
    h2 = jnp.maximum(
        jnp.dot(h1.astype(jnp.bfloat16), w2.astype(jnp.bfloat16),
                preferred_element_type=jnp.float32) + b2, 0.0)
    out = jnp.dot(h2.astype(jnp.bfloat16), w3.astype(jnp.bfloat16),
                  preferred_element_type=jnp.float32) + b3
    return jnp.tanh(out)


if __name__ == "__main__":
    state_size = 16
    action_size = 4
    batch = 8

    key = jax.random.PRNGKey(0)
    k_params, k_states = jax.random.split(key)
    params = init_params(k_params, state_size, action_size)
    states = jax.random.normal(k_states, (batch, state_size), jnp.float32)

    out = jax.block_until_ready(policy_forward(states, params))
    ref = reference_forward(states, params)

    assert out.shape == (batch, action_size)
    assert jnp.allclose(out, ref, atol=1e-4, rtol=1e-4), "mismatch vs reference"

    # Also exercise the multi-tile (megacore) path with a larger, non-multiple batch.
    big = jax.random.normal(jax.random.PRNGKey(1), (100, state_size), jnp.float32)
    out_big = jax.block_until_ready(policy_forward(big, params))
    ref_big = reference_forward(big, params)
    assert out_big.shape == (100, action_size)
    assert jnp.allclose(out_big, ref_big, atol=1e-4, rtol=1e-4), "mismatch vs reference (big)"

    # NOTE: BatchNorm uses training-mode (per-call batch) statistics, matching the
    # module's default behaviour.  At B=8 the kernel degenerates to one tile and is
    # launch-overhead bound by construction; at realistic batch sizes the batch is
    # split into >=2 tiles (<=512 rows each) with weights resident in VMEM.
    print("KERNEL_OK")
</pallas_src>

<mosaic_0001>
module attributes {stable_mosaic.version = 11 : i64} {
  func.func @policy_kernel(%arg0: i32, %arg1: memref<8x16xf32, #tpu.memory_space<vmem>>, %arg2: memref<1x16xf32, #tpu.memory_space<vmem>>, %arg3: memref<1x16xf32, #tpu.memory_space<vmem>>, %arg4: memref<16x512xbf16, #tpu.memory_space<vmem>>, %arg5: memref<1x512xf32, #tpu.memory_space<vmem>>, %arg6: memref<512x256xbf16, #tpu.memory_space<vmem>>, %arg7: memref<1x256xf32, #tpu.memory_space<vmem>>, %arg8: memref<256x128xbf16, #tpu.memory_space<vmem>>, %arg9: memref<1x128xf32, #tpu.memory_space<vmem>>, %arg10: memref<8x128xf32, #tpu.memory_space<vmem>>) attributes {dimension_semantics = [#tpu.dimension_semantics<parallel>], iteration_bounds = array<i64: 1>, scalar_prefetch = 0 : i64, scratch_operands = 0 : i64, tpu.core_type = #tpu.core_type<tc>, window_params = [{transform_indices = @transform_0, window_bounds = array<i64: 8, 16>}, {pipeline_mode = #tpu.pipeline_mode<synchronous>, transform_indices = @transform_1, window_bounds = array<i64: 1, 16>}, {pipeline_mode = #tpu.pipeline_mode<synchronous>, transform_indices = @transform_2, window_bounds = array<i64: 1, 16>}, {pipeline_mode = #tpu.pipeline_mode<synchronous>, transform_indices = @transform_3, window_bounds = array<i64: 16, 512>}, {pipeline_mode = #tpu.pipeline_mode<synchronous>, transform_indices = @transform_4, window_bounds = array<i64: 1, 512>}, {pipeline_mode = #tpu.pipeline_mode<synchronous>, transform_indices = @transform_5, window_bounds = array<i64: 512, 256>}, {pipeline_mode = #tpu.pipeline_mode<synchronous>, transform_indices = @transform_6, window_bounds = array<i64: 1, 256>}, {pipeline_mode = #tpu.pipeline_mode<synchronous>, transform_indices = @transform_7, window_bounds = array<i64: 256, 128>}, {pipeline_mode = #tpu.pipeline_mode<synchronous>, transform_indices = @transform_8, window_bounds = array<i64: 1, 128>}, {transform_indices = @transform_9, window_bounds = array<i64: 8, 128>}]} {
    %c0 = arith.constant 0 : index
    %c0_0 = arith.constant 0 : index
    %0 = vector.load %arg1[%c0, %c0_0] : memref<8x16xf32, #tpu.memory_space<vmem>>, vector<8x16xf32>
    %c0_1 = arith.constant 0 : index
    %c0_2 = arith.constant 0 : index
    %1 = vector.load %arg2[%c0_1, %c0_2] : memref<1x16xf32, #tpu.memory_space<vmem>>, vector<1x16xf32>
    %2 = vector.broadcast %1 : vector<1x16xf32> to vector<8x16xf32>
    %3 = arith.mulf %0, %2 : vector<8x16xf32>
    %c0_3 = arith.constant 0 : index
    %c0_4 = arith.constant 0 : index
    %4 = vector.load %arg3[%c0_3, %c0_4] : memref<1x16xf32, #tpu.memory_space<vmem>>, vector<1x16xf32>
    %5 = vector.broadcast %4 : vector<1x16xf32> to vector<8x16xf32>
    %6 = arith.addf %3, %5 : vector<8x16xf32>
    %7 = arith.truncf %6 : vector<8x16xf32> to vector<8x16xbf16>
    %c0_5 = arith.constant 0 : index
    %c0_6 = arith.constant 0 : index
    %8 = vector.load %arg4[%c0_5, %c0_6] : memref<16x512xbf16, #tpu.memory_space<vmem>>, vector<16x512xbf16>
    %cst = arith.constant dense<0.000000e+00> : vector<8x512xf32>
    %9 = tpu.matmul %7, %8, %cst {dimension_numbers = #tpu.dot_dimension_numbers<[1], [0], [0], [1], [0, 0, 1, 1], [], []>} : vector<8x16xbf16>, vector<16x512xbf16>, vector<8x512xf32> -> vector<8x512xf32>
    %c0_7 = arith.constant 0 : index
    %c0_8 = arith.constant 0 : index
    %10 = vector.load %arg5[%c0_7, %c0_8] : memref<1x512xf32, #tpu.memory_space<vmem>>, vector<1x512xf32>
    %11 = vector.broadcast %10 : vector<1x512xf32> to vector<8x512xf32>
    %12 = arith.addf %9, %11 : vector<8x512xf32>
    %cst_9 = arith.constant 0.000000e+00 : f32
    %13 = vector.broadcast %cst_9 : f32 to vector<8x512xf32>
    %14 = arith.maximumf %12, %13 : vector<8x512xf32>
    %15 = arith.truncf %14 : vector<8x512xf32> to vector<8x512xbf16>
    %c0_10 = arith.constant 0 : index
    %c0_11 = arith.constant 0 : index
    %16 = vector.load %arg6[%c0_10, %c0_11] : memref<512x256xbf16, #tpu.memory_space<vmem>>, vector<512x256xbf16>
    %cst_12 = arith.constant dense<0.000000e+00> : vector<8x256xf32>
    %17 = tpu.matmul %15, %16, %cst_12 {dimension_numbers = #tpu.dot_dimension_numbers<[1], [0], [0], [1], [0, 0, 1, 1], [], []>} : vector<8x512xbf16>, vector<512x256xbf16>, vector<8x256xf32> -> vector<8x256xf32>
    %c0_13 = arith.constant 0 : index
    %c0_14 = arith.constant 0 : index
    %18 = vector.load %arg7[%c0_13, %c0_14] : memref<1x256xf32, #tpu.memory_space<vmem>>, vector<1x256xf32>
    %19 = vector.broadcast %18 : vector<1x256xf32> to vector<8x256xf32>
    %20 = arith.addf %17, %19 : vector<8x256xf32>
    %cst_15 = arith.constant 0.000000e+00 : f32
    %21 = vector.broadcast %cst_15 : f32 to vector<8x256xf32>
    %22 = arith.maximumf %20, %21 : vector<8x256xf32>
    %23 = arith.truncf %22 : vector<8x256xf32> to vector<8x256xbf16>
    %c0_16 = arith.constant 0 : index
    %c0_17 = arith.constant 0 : index
    %24 = vector.load %arg8[%c0_16, %c0_17] : memref<256x128xbf16, #tpu.memory_space<vmem>>, vector<256x128xbf16>
    %cst_18 = arith.constant dense<0.000000e+00> : vector<8x128xf32>
    %25 = tpu.matmul %23, %24, %cst_18 {dimension_numbers = #tpu.dot_dimension_numbers<[1], [0], [0], [1], [0, 0, 1, 1], [], []>} : vector<8x256xbf16>, vector<256x128xbf16>, vector<8x128xf32> -> vector<8x128xf32>
    %c0_19 = arith.constant 0 : index
    %c0_20 = arith.constant 0 : index
    %26 = vector.load %arg9[%c0_19, %c0_20] : memref<1x128xf32, #tpu.memory_space<vmem>>, vector<1x128xf32>
    %27 = vector.broadcast %26 : vector<1x128xf32> to vector<8x128xf32>
    %28 = arith.addf %25, %27 : vector<8x128xf32>
    %29 = math.tanh %28 : vector<8x128xf32>
    %c0_21 = arith.constant 0 : index
    %c0_22 = arith.constant 0 : index
    %30 = vector.load %arg10[%c0_21, %c0_22] : memref<8x128xf32, #tpu.memory_space<vmem>>, vector<8x128xf32>
    tpu.vector_store %arg10[%c0_21, %c0_22], %29 {strides = array<i32>} : memref<8x128xf32, #tpu.memory_space<vmem>>, vector<8x128xf32>,
    return
  }
  func.func @transform_0(%arg0: i32) -> (i32, i32) {
    %c0_i32 = arith.constant 0 : i32
    %c0_i32_0 = arith.constant 0 : i32
    return %arg0, %c0_i32 : i32, i32
  }
  func.func @transform_1(%arg0: i32) -> (i32, i32) {
    %c0_i32 = arith.constant 0 : i32
    %c0_i32_0 = arith.constant 0 : i32
    %c0_i32_1 = arith.constant 0 : i32
    return %c0_i32, %c0_i32_0 : i32, i32
  }
  func.func @transform_2(%arg0: i32) -> (i32, i32) {
    %c0_i32 = arith.constant 0 : i32
    %c0_i32_0 = arith.constant 0 : i32
    %c0_i32_1 = arith.constant 0 : i32
    return %c0_i32, %c0_i32_0 : i32, i32
  }
  func.func @transform_3(%arg0: i32) -> (i32, i32) {
    %c0_i32 = arith.constant 0 : i32
    %c0_i32_0 = arith.constant 0 : i32
    %c0_i32_1 = arith.constant 0 : i32
    return %c0_i32, %c0_i32_0 : i32, i32
  }
  func.func @transform_4(%arg0: i32) -> (i32, i32) {
    %c0_i32 = arith.constant 0 : i32
    %c0_i32_0 = arith.constant 0 : i32
    %c0_i32_1 = arith.constant 0 : i32
    return %c0_i32, %c0_i32_0 : i32, i32
  }
  func.func @transform_5(%arg0: i32) -> (i32, i32) {
    %c0_i32 = arith.constant 0 : i32
    %c0_i32_0 = arith.constant 0 : i32
    %c0_i32_1 = arith.constant 0 : i32
    return %c0_i32, %c0_i32_0 : i32, i32
  }
  func.func @transform_6(%arg0: i32) -> (i32, i32) {
    %c0_i32 = arith.constant 0 : i32
    %c0_i32_0 = arith.constant 0 : i32
    %c0_i32_1 = arith.constant 0 : i32
    return %c0_i32, %c0_i32_0 : i32, i32
  }
  func.func @transform_7(%arg0: i32) -> (i32, i32) {
    %c0_i32 = arith.constant 0 : i32
    %c0_i32_0 = arith.constant 0 : i32
    %c0_i32_1 = arith.constant 0 : i32
    return %c0_i32, %c0_i32_0 : i32, i32
  }
  func.func @transform_8(%arg0: i32) -> (i32, i32) {
    %c0_i32 = arith.constant 0 : i32
    %c0_i32_0 = arith.constant 0 : i32
    %c0_i32_1 = arith.constant 0 : i32
    return %c0_i32, %c0_i32_0 : i32, i32
  }
  func.func @transform_9(%arg0: i32) -> (i32, i32) {
    %c0_i32 = arith.constant 0 : i32
    %c0_i32_0 = arith.constant 0 : i32
    return %arg0, %c0_i32 : i32, i32
  }
}

</mosaic_0001>

<llo_original>
// kernel: policy_forward.1
$region0: #{policy_forward.1}
  #allocation0 [shape = 'u32[]', space=smem, size = 0x4, offset = 0x4, fixed_abs, tag = 'smem constant byte address 0x4 - core index']
  #allocation1 [shape = 'u32[144,128]{1,0:T(1,128)}', space=vmem, size = 0x12000, scoped, tag = 'internal scratch']
  %s0 = inlined_call_operand.vmem [shape: f32[8,16], index: 0, kind: input, shape index: {}]
  %s1 = inlined_call_operand.vmem [shape: f32[1,16], index: 1, kind: input, shape index: {}]
  %s2 = inlined_call_operand.vmem [shape: f32[1,16], index: 2, kind: input, shape index: {}]
  %s3 = inlined_call_operand.vmem [shape: bf16[16,512], index: 3, kind: input, shape index: {}]
  %s4 = inlined_call_operand.vmem [shape: f32[1,512], index: 4, kind: input, shape index: {}]
  %s5 = inlined_call_operand.vmem [shape: bf16[512,256], index: 5, kind: input, shape index: {}]
  %s6 = inlined_call_operand.vmem [shape: f32[1,256], index: 6, kind: input, shape index: {}]
  %s7 = inlined_call_operand.vmem [shape: bf16[256,128], index: 7, kind: input, shape index: {}]
  %s8 = inlined_call_operand.vmem [shape: f32[1,128], index: 8, kind: input, shape index: {}]
  %s9 = inlined_call_operand.vmem [shape: f32[8,128], index: 9, kind: output, shape index: {}]
  %s10 = sld [smem:[#allocation0]]
  $region46: #{policy_forward.1} parent=0
    _
  %s12 = ssub.s32 1, %s10
  %s13 = scalar_select 0, %s12, %s10
  // Predicated region
  $region2: #{policy_forward.1} parent=0 // pred_check
    _
  $region3: #{policy_forward.1} parent=0 // pred_check_branch
    %15 = sbr.rel (0) target = $region5
  $region4: #{policy_forward.1} parent=0 // pred_region
    _
  $region5: #{policy_forward.1} parent=0 // pred_fallthru
    _
  // Predicated region
  $region6: #{policy_forward.1} parent=0 // pred_check
    _
  $region7: #{policy_forward.1} parent=0 // pred_check_branch
    %17 = sbr.rel (0) target = $region9
  $region8: #{policy_forward.1} parent=0 // pred_region
    _
  $region9: #{policy_forward.1} parent=0 // pred_fallthru
    _
  // Predicated region
  $region10: #{policy_forward.1} parent=0 // pred_check
    _
  $region11: #{policy_forward.1} parent=0 // pred_check_branch
    %19 = sbr.rel (0) target = $region13
  $region12: #{policy_forward.1} parent=0 // pred_region
    _
  $region13: #{policy_forward.1} parent=0 // pred_fallthru
    _
  // Predicated region
  $region14: #{policy_forward.1} parent=0 // pred_check
    _
  $region15: #{policy_forward.1} parent=0 // pred_check_branch
    %21 = sbr.rel (0) target = $region17
  $region16: #{policy_forward.1} parent=0 // pred_region
    _
  $region17: #{policy_forward.1} parent=0 // pred_fallthru
    _
  // Predicated region
  $region18: #{policy_forward.1} parent=0 // pred_check
    _
  $region19: #{policy_forward.1} parent=0 // pred_check_branch
    %23 = sbr.rel (0) target = $region21
  $region20: #{policy_forward.1} parent=0 // pred_region
    _
  $region21: #{policy_forward.1} parent=0 // pred_fallthru
    _
  // Predicated region
  $region22: #{policy_forward.1} parent=0 // pred_check
    _
  $region23: #{policy_forward.1} parent=0 // pred_check_branch
    %25 = sbr.rel (0) target = $region25
  $region24: #{policy_forward.1} parent=0 // pred_region
    _
  $region25: #{policy_forward.1} parent=0 // pred_fallthru
    _
  // Predicated region
  $region26: #{policy_forward.1} parent=0 // pred_check
    _
  $region27: #{policy_forward.1} parent=0 // pred_check_branch
    %27 = sbr.rel (0) target = $region29
  $region28: #{policy_forward.1} parent=0 // pred_region
    _
  $region29: #{policy_forward.1} parent=0 // pred_fallthru
    _
  // Predicated region
  $region30: #{policy_forward.1} parent=0 // pred_check
    _
  $region31: #{policy_forward.1} parent=0 // pred_check_branch
    %29 = sbr.rel (0) target = $region33
  $region32: #{policy_forward.1} parent=0 // pred_region
    _
  $region33: #{policy_forward.1} parent=0 // pred_fallthru
    _
  // Predicated region
  $region34: #{policy_forward.1} parent=0 // pred_check
    _
  $region35: #{policy_forward.1} parent=0 // pred_check_branch
    %31 = sbr.rel (0) target = $region37
  $region36: #{policy_forward.1} parent=0 // pred_region
    _
  $region37: #{policy_forward.1} parent=0 // pred_fallthru
    _
  %v33 = vld [vmem:[%s0] sm:$0xff]
  %v34 = vld [vmem:[%s1] sm:$0x1]
  %v36 = vlaneseq
  %v37 = vshrl.u32 %v36, 7
  %v38 = vsub.s32 0, %v37
  %v39 = vrot.slane %v34, %v38
  %v41 = vmul.f32 %v33, %v39
  %v42 = vld [vmem:[%s2] sm:$0x1]
  %v44 = vlaneseq
  %v45 = vshrl.u32 %v44, 7
  %v46 = vsub.s32 0, %v45
  %v47 = vrot.slane %v42, %v46
  %v49 = vadd.f32 %v41, %v47
  %v50 = vpack.c.bf16 %v49, %v49
  %v51 = vld [vmem:[%s3] sm:$0xff]
  %v52 = vld [vmem:[%s3 + $0x8] sm:$0xff]
  %v53 = vld [vmem:[%s3 + $0x10] sm:$0xff]
  %v54 = vld [vmem:[%s3 + $0x18] sm:$0xff]
  %v55 = vld [vmem:[%s4] sm:$0xf]
  %v57 = vlaneseq
  %v58 = vshrl.u32 %v57, 7
  %v59 = vsub.s32 0, %v58
  %v60 = vrot.slane %v55, %v59
  %v61 = vlaneseq
  %v62 = vshrl.u32 %v61, 7
  %v63 = vsub.s32 1, %v62
  %v64 = vrot.slane %v55, %v63
  %v65 = vlaneseq
  %v66 = vshrl.u32 %v65, 7
  %v67 = vsub.s32 2, %v66
  %v68 = vrot.slane %v55, %v67
  %v69 = vlaneseq
  %v70 = vshrl.u32 %v69, 7
  %v71 = vsub.s32 3, %v70
  %v72 = vrot.slane %v55, %v71
  %v81 = vunpack.c.l.b16 %v51
  %v82 = vunpack.c.h.b16 %v51
  %v83 = vunpack.c.l.b16 %v52
  %v84 = vunpack.c.h.b16 %v52
  %v85 = vunpack.c.l.b16 %v53
  %v86 = vunpack.c.h.b16 %v53
  %v87 = vunpack.c.l.b16 %v54
  %v88 = vunpack.c.h.b16 %v54
  %v89 = vpack.c.b16 %v85, %v81
  %v90 = vpack.c.b16 %v86, %v82
  %v91 = vpack.c.b16 %v87, %v83
  %v92 = vpack.c.b16 %v88, %v84
  %vm97 = vcmask 130048
  %v99 = vsel %vm97, %v50, 0
  %101 = vmatprep.subr.bf16.mxu0 0
  %102 = vmatpush1.bf16.msra.mxu0 0
  %103 = vmatprep.subr.bf16.mxu0 0
  %104 = vmatpush1.bf16.msra.mxu0 0
  %105 = vmatprep.subr.bf16.mxu0 0
  %106 = vmatpush1.bf16.msra.mxu0 0
  %107 = vmatprep.subr.bf16.mxu0 0
  %108 = vmatpush1.bf16.msra.mxu0 0
  %109 = vmatprep.subr.bf16.mxu0 0
  %110 = vmatpush1.bf16.msra.mxu0 0
  %111 = vmatprep.subr.bf16.mxu0 0
  %112 = vmatpush1.bf16.msra.mxu0 0
  %113 = vmatprep.subr.bf16.mxu0 0
  %114 = vmatpush1.bf16.msra.mxu0 0
  %115 = vmatprep.subr.bf16.mxu0 %v90
  %116 = vmatpush1.bf16.msra.mxu0 %v89
  %117 = vmatprep.subr.bf16.mxu0 0
  %118 = vmatpush2.bf16.msra.mxu0 0
  %119 = vmatprep.subr.bf16.mxu0 0
  %120 = vmatpush2.bf16.msra.mxu0 0
  %121 = vmatprep.subr.bf16.mxu0 0
  %122 = vmatpush2.bf16.msra.mxu0 0
  %123 = vmatprep.subr.bf16.mxu0 0
  %124 = vmatpush2.bf16.msra.mxu0 0
  %125 = vmatprep.subr.bf16.mxu0 0
  %126 = vmatpush2.bf16.msra.mxu0 0
  %127 = vmatprep.subr.bf16.mxu0 0
  %128 = vmatpush2.bf16.msra.mxu0 0
  %129 = vmatprep.subr.bf16.mxu0 0
  %130 = vmatpush2.bf16.msra.mxu0 0
  %131 = vmatprep.subr.bf16.mxu0 0
  %132 = vmatpush2.bf16.msra.mxu0 0
  %133 = vmatprep.mubr.bf16.mxu0 0
  %134 = vmatmul.mubr.bf16.gmra.mxu0 %v99
  %v135 = vpop.f32.mrf.mxu0
  %v136 = vadd.f32 %v60, %v135
  %v137 = vpop.f32.mrf.mxu0
  %v138 = vadd.f32 %v64, %v137
  %v139 = vpop.f32.mrf.mxu0
  %v140 = vpop.f32.mrf.mxu0
  %141 = vdwg.mxu0
  %142 = vmatprep.subr.bf16.mxu0 0
  %143 = vmatpush1.bf16.msra.mxu0 0
  %144 = vmatprep.subr.bf16.mxu0 0
  %145 = vmatpush1.bf16.msra.mxu0 0
  %146 = vmatprep.subr.bf16.mxu0 0
  %147 = vmatpush1.bf16.msra.mxu0 0
  %148 = vmatprep.subr.bf16.mxu0 0
  %149 = vmatpush1.bf16.msra.mxu0 0
  %150 = vmatprep.subr.bf16.mxu0 0
  %151 = vmatpush1.bf16.msra.mxu0 0
  %152 = vmatprep.subr.bf16.mxu0 0
  %153 = vmatpush1.bf16.msra.mxu0 0
  %154 = vmatprep.subr.bf16.mxu0 0
  %155 = vmatpush1.bf16.msra.mxu0 0
  %156 = vmatprep.subr.bf16.mxu0 %v92
  %157 = vmatpush1.bf16.msra.mxu0 %v91
  %158 = vmatprep.subr.bf16.mxu0 0
  %159 = vmatpush2.bf16.msra.mxu0 0
  %160 = vmatprep.subr.bf16.mxu0 0
  %161 = vmatpush2.bf16.msra.mxu0 0
  %162 = vmatprep.subr.bf16.mxu0 0
  %163 = vmatpush2.bf16.msra.mxu0 0
  %164 = vmatprep.subr.bf16.mxu0 0
  %165 = vmatpush2.bf16.msra.mxu0 0
  %166 = vmatprep.subr.bf16.mxu0 0
  %167 = vmatpush2.bf16.msra.mxu0 0
  %168 = vmatprep.subr.bf16.mxu0 0
  %169 = vmatpush2.bf16.msra.mxu0 0
  %170 = vmatprep.subr.bf16.mxu0 0
  %171 = vmatpush2.bf16.msra.mxu0 0
  %172 = vmatprep.subr.bf16.mxu0 0
  %173 = vmatpush2.bf16.msra.mxu0 0
  %174 = vmatprep.mubr.bf16.mxu0 0
  %175 = vmatmul.mubr.bf16.gmra.mxu0 %v99
  %v176 = vpop.f32.mrf.mxu0
  %v177 = vadd.f32 %v68, %v176
  %v178 = vpop.f32.mrf.mxu0
  %v179 = vadd.f32 %v72, %v178
  %v180 = vpop.f32.mrf.mxu0
  %v181 = vpop.f32.mrf.mxu0
  %182 = vdwg.mxu0
  %v183 = vmax.f32 %v136, 0.0
  %v184 = vmax.f32 %v138, 0.0
  %v185 = vmax.f32 %v177, 0.0
  %v186 = vmax.f32 %v179, 0.0
  %v187 = vpack.c.bf16 %v183, %v183
  %v188 = vpack.c.bf16 %v184, %v184
  %v189 = vpack.c.bf16 %v185, %v185
  %v190 = vpack.c.bf16 %v186, %v186
  %v191 = vld [vmem:[%s5] sm:$0xff]
  %v192 = vld [vmem:[%s5 + $0x8] sm:$0xff]
  %v193 = vld [vmem:[%s5 + $0x10] sm:$0xff]
  %v194 = vld [vmem:[%s5 + $0x18] sm:$0xff]
  %v195 = vld [vmem:[%s5 + $0x20] sm:$0xff]
  %v196 = vld [vmem:[%s5 + $0x28] sm:$0xff]
  %v197 = vld [vmem:[%s5 + $0x30] sm:$0xff]
  %v198 = vld [vmem:[%s5 + $0x38] sm:$0xff]
  %v199 = vld [vmem:[%s5 + $0x40] sm:$0xff]
  %v200 = vld [vmem:[%s5 + $0x48] sm:$0xff]
  %v201 = vld [vmem:[%s5 + $0x50] sm:$0xff]
  %v202 = vld [vmem:[%s5 + $0x58] sm:$0xff]
  %v203 = vld [vmem:[%s5 + $0x60] sm:$0xff]
  %v204 = vld [vmem:[%s5 + $0x68] sm:$0xff]
  %v205 = vld [vmem:[%s5 + $0x70] sm:$0xff]
  %v206 = vld [vmem:[%s5 + $0x78] sm:$0xff]
  %v207 = vld [vmem:[%s5 + $0x80] sm:$0xff]
  %v208 = vld [vmem:[%s5 + $0x88] sm:$0xff]
  %v209 = vld [vmem:[%s5 + $0x90] sm:$0xff]
  %v210 = vld [vmem:[%s5 + $0x98] sm:$0xff]
  %v211 = vld [vmem:[%s5 + $0xa0] sm:$0xff]
  %v212 = vld [vmem:[%s5 + $0xa8] sm:$0xff]
  %v213 = vld [vmem:[%s5 + $0xb0] sm:$0xff]
  %v214 = vld [vmem:[%s5 + $0xb8] sm:$0xff]
  %v215 = vld [vmem:[%s5 + $0xc0] sm:$0xff]
  %v216 = vld [vmem:[%s5 + $0xc8] sm:$0xff]
  %v217 = vld [vmem:[%s5 + $0xd0] sm:$0xff]
  %v218 = vld [vmem:[%s5 + $0xd8] sm:$0xff]
  %v219 = vld [vmem:[%s5 + $0xe0] sm:$0xff]
  %v220 = vld [vmem:[%s5 + $0xe8] sm:$0xff]
  %v221 = vld [vmem:[%s5 + $0xf0] sm:$0xff]
  %v222 = vld [vmem:[%s5 + $0xf8] sm:$0xff]
  %v223 = vld [vmem:[%s5 + $0x100] sm:$0xff]
  %v224 = vld [vmem:[%s5 + $0x108] sm:$0xff]
  %v225 = vld [vmem:[%s5 + $0x110] sm:$0xff]
  %v226 = vld [vmem:[%s5 + $0x118] sm:$0xff]
  %v227 = vld [vmem:[%s5 + $0x120] sm:$0xff]
  %v228 = vld [vmem:[%s5 + $0x128] sm:$0xff]
  %v229 = vld [vmem:[%s5 + $0x130] sm:$0xff]
  %v230 = vld [vmem:[%s5 + $0x138] sm:$0xff]
  %v231 = vld [vmem:[%s5 + $0x140] sm:$0xff]
  %v232 = vld [vmem:[%s5 + $0x148] sm:$0xff]
  %v233 = vld [vmem:[%s5 + $0x150] sm:$0xff]
  %v234 = vld [vmem:[%s5 + $0x158] sm:$0xff]
  %v235 = vld [vmem:[%s5 + $0x160] sm:$0xff]
  %v236 = vld [vmem:[%s5 + $0x168] sm:$0xff]
  %v237 = vld [vmem:[%s5 + $0x170] sm:$0xff]
  %v238 = vld [vmem:[%s5 + $0x178] sm:$0xff]
  %v239 = vld [vmem:[%s5 + $0x180] sm:$0xff]
  %v240 = vld [vmem:[%s5 + $0x188] sm:$0xff]
  %v241 = vld [vmem:[%s5 + $0x190] sm:$0xff]
  %v242 = vld [vmem:[%s5 + $0x198] sm:$0xff]
  %v243 = vld [vmem:[%s5 + $0x1a0] sm:$0xff]
  %v244 = vld [vmem:[%s5 + $0x1a8] sm:$0xff]
  %v245 = vld [vmem:[%s5 + $0x1b0] sm:$0xff]
  %v246 = vld [vmem:[%s5 + $0x1b8] sm:$0xff]
  %v247 = vld [vmem:[%s5 + $0x1c0] sm:$0xff]
  %v248 = vld [vmem:[%s5 + $0x1c8] sm:$0xff]
  %v249 = vld [vmem:[%s5 + $0x1d0] sm:$0xff]
  %v250 = vld [vmem:[%s5 + $0x1d8] sm:$0xff]
  %v251 = vld [vmem:[%s5 + $0x1e0] sm:$0xff]
  %v252 = vld [vmem:[%s5 + $0x1e8] sm:$0xff]
  %v253 = vld [vmem:[%s5 + $0x1f0] sm:$0xff]
  %v254 = vld [vmem:[%s5 + $0x1f8] sm:$0xff]
  %v255 = vld [vmem:[%s6] sm:$0x3]
  %v257 = vlaneseq
  %v258 = vshrl.u32 %v257, 7
  %v259 = vsub.s32 0, %v258
  %v260 = vrot.slane %v255, %v259
  %v261 = vlaneseq
  %v262 = vshrl.u32 %v261, 7
  %v263 = vsub.s32 1, %v262
  %v264 = vrot.slane %v255, %v263
  %v331 = vunpack.c.l.b16 %v191
  %v332 = vunpack.c.h.b16 %v191
  %v333 = vunpack.c.l.b16 %v192
  %v334 = vunpack.c.h.b16 %v192
  %v335 = vunpack.c.l.b16 %v193
  %v336 = vunpack.c.h.b16 %v193
  %v337 = vunpack.c.l.b16 %v194
  %v338 = vunpack.c.h.b16 %v194
  %v339 = vunpack.c.l.b16 %v195
  %v340 = vunpack.c.h.b16 %v195
  %v341 = vunpack.c.l.b16 %v196
  %v342 = vunpack.c.h.b16 %v196
  %v343 = vunpack.c.l.b16 %v197
  %v344 = vunpack.c.h.b16 %v197
  %v345 = vunpack.c.l.b16 %v198
  %v346 = vunpack.c.h.b16 %v198
  %v347 = vunpack.c.l.b16 %v199
  %v348 = vunpack.c.h.b16 %v199
  %v349 = vunpack.c.l.b16 %v200
  %v350 = vunpack.c.h.b16 %v200
  %v351 = vunpack.c.l.b16 %v201
  %v352 = vunpack.c.h.b16 %v201
  %v353 = vunpack.c.l.b16 %v202
  %v354 = vunpack.c.h.b16 %v202
  %v355 = vunpack.c.l.b16 %v203
  %v356 = vunpack.c.h.b16 %v203
  %v357 = vunpack.c.l.b16 %v204
  %v358 = vunpack.c.h.b16 %v204
  %v359 = vunpack.c.l.b16 %v205
  %v360 = vunpack.c.h.b16 %v205
  %v361 = vunpack.c.l.b16 %v206
  %v362 = vunpack.c.h.b16 %v206
  %v363 = vunpack.c.l.b16 %v207
  %v364 = vunpack.c.h.b16 %v207
  %v365 = vunpack.c.l.b16 %v208
  %v366 = vunpack.c.h.b16 %v208
  %v367 = vunpack.c.l.b16 %v209
  %v368 = vunpack.c.h.b16 %v209
  %v369 = vunpack.c.l.b16 %v210
  %v370 = vunpack.c.h.b16 %v210
  %v371 = vunpack.c.l.b16 %v211
  %v372 = vunpack.c.h.b16 %v211
  %v373 = vunpack.c.l.b16 %v212
  %v374 = vunpack.c.h.b16 %v212
  %v375 = vunpack.c.l.b16 %v213
  %v376 = vunpack.c.h.b16 %v213
  %v377 = vunpack.c.l.b16 %v214
  %v378 = vunpack.c.h.b16 %v214
  %v379 = vunpack.c.l.b16 %v215
  %v380 = vunpack.c.h.b16 %v215
  %v381 = vunpack.c.l.b16 %v216
  %v382 = vunpack.c.h.b16 %v216
  %v383 = vunpack.c.l.b16 %v217
  %v384 = vunpack.c.h.b16 %v217
  %v385 = vunpack.c.l.b16 %v218
  %v386 = vunpack.c.h.b16 %v218
  %v387 = vunpack.c.l.b16 %v219
  %v388 = vunpack.c.h.b16 %v219
  %v389 = vunpack.c.l.b16 %v220
  %v390 = vunpack.c.h.b16 %v220
  %v391 = vunpack.c.l.b16 %v221
  %v392 = vunpack.c.h.b16 %v221
  %v393 = vunpack.c.l.b16 %v222
  %v394 = vunpack.c.h.b16 %v222
  %v395 = vunpack.c.l.b16 %v223
  %v396 = vunpack.c.h.b16 %v223
  %v397 = vunpack.c.l.b16 %v224
  %v398 = vunpack.c.h.b16 %v224
  %v399 = vunpack.c.l.b16 %v225
  %v400 = vunpack.c.h.b16 %v225
  %v401 = vunpack.c.l.b16 %v226
  %v402 = vunpack.c.h.b16 %v226
  %v403 = vunpack.c.l.b16 %v227
  %v404 = vunpack.c.h.b16 %v227
  %v405 = vunpack.c.l.b16 %v228
  %v406 = vunpack.c.h.b16 %v228
  %v407 = vunpack.c.l.b16 %v229
  %v408 = vunpack.c.h.b16 %v229
  %v409 = vunpack.c.l.b16 %v230
  %v410 = vunpack.c.h.b16 %v230
  %v411 = vunpack.c.l.b16 %v231
  %v412 = vunpack.c.h.b16 %v231
  %v413 = vunpack.c.l.b16 %v232
  %v414 = vunpack.c.h.b16 %v232
  %v415 = vunpack.c.l.b16 %v233
  %v416 = vunpack.c.h.b16 %v233
  %v417 = vunpack.c.l.b16 %v234
  %v418 = vunpack.c.h.b16 %v234
  %v419 = vunpack.c.l.b16 %v235
  %v420 = vunpack.c.h.b16 %v235
  %v421 = vunpack.c.l.b16 %v236
  %v422 = vunpack.c.h.b16 %v236
  %v423 = vunpack.c.l.b16 %v237
  %v424 = vunpack.c.h.b16 %v237
  %v425 = vunpack.c.l.b16 %v238
  %v426 = vunpack.c.h.b16 %v238
  %v427 = vunpack.c.l.b16 %v239
  %v428 = vunpack.c.h.b16 %v239
  %v429 = vunpack.c.l.b16 %v240
  %v430 = vunpack.c.h.b16 %v240
  %v431 = vunpack.c.l.b16 %v241
  %v432 = vunpack.c.h.b16 %v241
  %v433 = vunpack.c.l.b16 %v242
  %v434 = vunpack.c.h.b16 %v242
  %v435 = vunpack.c.l.b16 %v243
  %v436 = vunpack.c.h.b16 %v243
  %v437 = vunpack.c.l.b16 %v244
  %v438 = vunpack.c.h.b16 %v244
  %v439 = vunpack.c.l.b16 %v245
  %v440 = vunpack.c.h.b16 %v245
  %v441 = vunpack.c.l.b16 %v246
  %v442 = vunpack.c.h.b16 %v246
  %v443 = vunpack.c.l.b16 %v247
  %v444 = vunpack.c.h.b16 %v247
  %v445 = vunpack.c.l.b16 %v248
  %v446 = vunpack.c.h.b16 %v248
  %v447 = vunpack.c.l.b16 %v249
  %v448 = vunpack.c.h.b16 %v249
  %v449 = vunpack.c.l.b16 %v250
  %v450 = vunpack.c.h.b16 %v250
  %v451 = vunpack.c.l.b16 %v251
  %v452 = vunpack.c.h.b16 %v251
  %v453 = vunpack.c.l.b16 %v252
  %v454 = vunpack.c.h.b16 %v252
  %v455 = vunpack.c.l.b16 %v253
  %v456 = vunpack.c.h.b16 %v253
  %v457 = vunpack.c.l.b16 %v254
  %v458 = vunpack.c.h.b16 %v254
  %v459 = vpack.c.b16 %v333, %v331
  %v460 = vpack.c.b16 %v334, %v332
  %v461 = vpack.c.b16 %v337, %v335
  %v462 = vpack.c.b16 %v338, %v336
  %v463 = vpack.c.b16 %v341, %v339
  %v464 = vpack.c.b16 %v342, %v340
  %v465 = vpack.c.b16 %v345, %v343
  %v466 = vpack.c.b16 %v346, %v344
  %v467 = vpack.c.b16 %v349, %v347
  %v468 = vpack.c.b16 %v350, %v348
  %v469 = vpack.c.b16 %v353, %v351
  %v470 = vpack.c.b16 %v354, %v352
  %v471 = vpack.c.b16 %v357, %v355
  %v472 = vpack.c.b16 %v358, %v356
  %v473 = vpack.c.b16 %v361, %v359
  %v474 = vpack.c.b16 %v362, %v360
  %v475 = vpack.c.b16 %v365, %v363
  %v476 = vpack.c.b16 %v366, %v364
  %v477 = vpack.c.b16 %v369, %v367
  %v478 = vpack.c.b16 %v370, %v368
  %v479 = vpack.c.b16 %v373, %v371
  %v480 = vpack.c.b16 %v374, %v372
  %v481 = vpack.c.b16 %v377, %v375
  %v482 = vpack.c.b16 %v378, %v376
  %v483 = vpack.c.b16 %v381, %v379
  %v484 = vpack.c.b16 %v382, %v380
  %v485 = vpack.c.b16 %v385, %v383
  %v486 = vpack.c.b16 %v386, %v384
  %v487 = vpack.c.b16 %v389, %v387
  %v488 = vpack.c.b16 %v390, %v388
  %v489 = vpack.c.b16 %v393, %v391
  %v490 = vpack.c.b16 %v394, %v392
  %v491 = vpack.c.b16 %v397, %v395
  %v492 = vpack.c.b16 %v398, %v396
  %v493 = vpack.c.b16 %v401, %v399
  %v494 = vpack.c.b16 %v402, %v400
  %v495 = vpack.c.b16 %v405, %v403
  %v496 = vpack.c.b16 %v406, %v404
  %v497 = vpack.c.b16 %v409, %v407
  %v498 = vpack.c.b16 %v410, %v408
  %v499 = vpack.c.b16 %v413, %v411
  %v500 = vpack.c.b16 %v414, %v412
  %v501 = vpack.c.b16 %v417, %v415
  %v502 = vpack.c.b16 %v418, %v416
  %v503 = vpack.c.b16 %v421, %v419
  %v504 = vpack.c.b16 %v422, %v420
  %v505 = vpack.c.b16 %v425, %v423
  %v506 = vpack.c.b16 %v426, %v424
  %v507 = vpack.c.b16 %v429, %v427
  %v508 = vpack.c.b16 %v430, %v428
  %v509 = vpack.c.b16 %v433, %v431
  %v510 = vpack.c.b16 %v434, %v432
  %v511 = vpack.c.b16 %v437, %v435
  %v512 = vpack.c.b16 %v438, %v436
  %v513 = vpack.c.b16 %v441, %v439
  %v514 = vpack.c.b16 %v442, %v440
  %v515 = vpack.c.b16 %v445, %v443
  %v516 = vpack.c.b16 %v446, %v444
  %v517 = vpack.c.b16 %v449, %v447
  %v518 = vpack.c.b16 %v450, %v448
  %v519 = vpack.c.b16 %v453, %v451
  %v520 = vpack.c.b16 %v454, %v452
  %v521 = vpack.c.b16 %v457, %v455
  %v522 = vpack.c.b16 %v458, %v456
  %587 = vmatprep.subr.bf16.mxu0 %v474
  %588 = vmatpush1.bf16.msra.mxu0 %v473
  %589 = vmatprep.subr.bf16.mxu0 %v472
  %590 = vmatpush1.bf16.msra.mxu0 %v471
  %591 = vmatprep.subr.bf16.mxu0 %v470
  %592 = vmatpush1.bf16.msra.mxu0 %v469
  %593 = vmatprep.subr.bf16.mxu0 %v468
  %594 = vmatpush1.bf16.msra.mxu0 %v467
  %595 = vmatprep.subr.bf16.mxu0 %v466
  %596 = vmatpush1.bf16.msra.mxu0 %v465
  %597 = vmatprep.subr.bf16.mxu0 %v464
  %598 = vmatpush1.bf16.msra.mxu0 %v463
  %599 = vmatprep.subr.bf16.mxu0 %v462
  %600 = vmatpush1.bf16.msra.mxu0 %v461
  %601 = vmatprep.subr.bf16.mxu0 %v460
  %602 = vmatpush1.bf16.msra.mxu0 %v459
  %603 = vmatprep.subr.bf16.mxu0 %v490
  %604 = vmatpush2.bf16.msra.mxu0 %v489
  %605 = vmatprep.subr.bf16.mxu0 %v488
  %606 = vmatpush2.bf16.msra.mxu0 %v487
  %607 = vmatprep.subr.bf16.mxu0 %v486
  %608 = vmatpush2.bf16.msra.mxu0 %v485
  %609 = vmatprep.subr.bf16.mxu0 %v484
  %610 = vmatpush2.bf16.msra.mxu0 %v483
  %611 = vmatprep.subr.bf16.mxu0 %v482
  %612 = vmatpush2.bf16.msra.mxu0 %v481
  %613 = vmatprep.subr.bf16.mxu0 %v480
  %614 = vmatpush2.bf16.msra.mxu0 %v479
  %615 = vmatprep.subr.bf16.mxu0 %v478
  %616 = vmatpush2.bf16.msra.mxu0 %v477
  %617 = vmatprep.subr.bf16.mxu0 %v476
  %618 = vmatpush2.bf16.msra.mxu0 %v475
  %619 = vmatprep.mubr.bf16.mxu0 %v188
  %620 = vmatmul.mubr.bf16.gmra.mxu0 %v187
  %v621 = vpop.f32.mrf.mxu0
  %v622 = vadd.f32 %v260, %v621
  %v623 = vpop.f32.mrf.mxu0
  %v624 = vadd.f32 %v264, %v623
  %v625 = vpop.f32.mrf.mxu0
  %v626 = vpop.f32.mrf.mxu0
  %627 = vdwg.mxu0
  %628 = vmatprep.subr.bf16.mxu0 %v506
  %629 = vmatpush1.bf16.msra.mxu0 %v505
  %630 = vmatprep.subr.bf16.mxu0 %v504
  %631 = vmatpush1.bf16.msra.mxu0 %v503
  %632 = vmatprep.subr.bf16.mxu0 %v502
  %633 = vmatpush1.bf16.msra.mxu0 %v501
  %634 = vmatprep.subr.bf16.mxu0 %v500
  %635 = vmatpush1.bf16.msra.mxu0 %v499
  %636 = vmatprep.subr.bf16.mxu0 %v498
  %637 = vmatpush1.bf16.msra.mxu0 %v497
  %638 = vmatprep.subr.bf16.mxu0 %v496
  %639 = vmatpush1.bf16.msra.mxu0 %v495
  %640 = vmatprep.subr.bf16.mxu0 %v494
  %641 = vmatpush1.bf16.msra.mxu0 %v493
  %642 = vmatprep.subr.bf16.mxu0 %v492
  %643 = vmatpush1.bf16.msra.mxu0 %v491
  %644 = vmatprep.subr.bf16.mxu0 %v522
  %645 = vmatpush2.bf16.msra.mxu0 %v521
  %646 = vmatprep.subr.bf16.mxu0 %v520
  %647 = vmatpush2.bf16.msra.mxu0 %v519
  %648 = vmatprep.subr.bf16.mxu0 %v518
  %649 = vmatpush2.bf16.msra.mxu0 %v517
  %650 = vmatprep.subr.bf16.mxu0 %v516
  %651 = vmatpush2.bf16.msra.mxu0 %v515
  %652 = vmatprep.subr.bf16.mxu0 %v514
  %653 = vmatpush2.bf16.msra.mxu0 %v513
  %654 = vmatprep.subr.bf16.mxu0 %v512
  %655 = vmatpush2.bf16.msra.mxu0 %v511
  %656 = vmatprep.subr.bf16.mxu0 %v510
  %657 = vmatpush2.bf16.msra.mxu0 %v509
  %658 = vmatprep.subr.bf16.mxu0 %v508
  %659 = vmatpush2.bf16.msra.mxu0 %v507
  %660 = vmatprep.mubr.bf16.mxu0 %v190
  %661 = vmatmul.mubr.bf16.gmra.mxu0 %v189
  %v662 = vpop.f32.mrf.mxu0
  %v663 = vadd.f32 %v622, %v662
  %v664 = vpop.f32.mrf.mxu0
  %v665 = vadd.f32 %v624, %v664
  %v666 = vpop.f32.mrf.mxu0
  %v667 = vpop.f32.mrf.mxu0
  %668 = vdwg.mxu0
  %v669 = vmax.f32 %v663, 0.0
  %v670 = vmax.f32 %v665, 0.0
  %v671 = vpack.c.bf16 %v669, %v669
  %v672 = vpack.c.bf16 %v670, %v670
  %v673 = vld [vmem:[%s7] sm:$0xf]
  %v674 = vld [vmem:[%s7 + $0x4] sm:$0xf]
  %v675 = vld [vmem:[%s7 + $0x8] sm:$0xf]
  %v676 = vld [vmem:[%s7 + $0xc] sm:$0xf]
  %v677 = vld [vmem:[%s7 + $0x10] sm:$0xf]
  %v678 = vld [vmem:[%s7 + $0x14] sm:$0xf]
  %v679 = vld [vmem:[%s7 + $0x18] sm:$0xf]
  %v680 = vld [vmem:[%s7 + $0x1c] sm:$0xf]
  %v681 = vld [vmem:[%s7 + $0x20] sm:$0xf]
  %v682 = vld [vmem:[%s7 + $0x24] sm:$0xf]
  %v683 = vld [vmem:[%s7 + $0x28] sm:$0xf]
  %v684 = vld [vmem:[%s7 + $0x2c] sm:$0xf]
  %v685 = vld [vmem:[%s7 + $0x30] sm:$0xf]
  %v686 = vld [vmem:[%s7 + $0x34] sm:$0xf]
  %v687 = vld [vmem:[%s7 + $0x38] sm:$0xf]
  %v688 = vld [vmem:[%s7 + $0x3c] sm:$0xf]
  %v689 = vld [vmem:[%s7 + $0x40] sm:$0xf]
  %v690 = vld [vmem:[%s7 + $0x44] sm:$0xf]
  %v691 = vld [vmem:[%s7 + $0x48] sm:$0xf]
  %v692 = vld [vmem:[%s7 + $0x4c] sm:$0xf]
  %v693 = vld [vmem:[%s7 + $0x50] sm:$0xf]
  %v694 = vld [vmem:[%s7 + $0x54] sm:$0xf]
  %v695 = vld [vmem:[%s7 + $0x58] sm:$0xf]
  %v696 = vld [vmem:[%s7 + $0x5c] sm:$0xf]
  %v697 = vld [vmem:[%s7 + $0x60] sm:$0xf]
  %v698 = vld [vmem:[%s7 + $0x64] sm:$0xf]
  %v699 = vld [vmem:[%s7 + $0x68] sm:$0xf]
  %v700 = vld [vmem:[%s7 + $0x6c] sm:$0xf]
  %v701 = vld [vmem:[%s7 + $0x70] sm:$0xf]
  %v702 = vld [vmem:[%s7 + $0x74] sm:$0xf]
  %v703 = vld [vmem:[%s7 + $0x78] sm:$0xf]
  %v704 = vld [vmem:[%s7 + $0x7c] sm:$0xf]
  %v705 = vld [vmem:[%s8] sm:$0x1]
  %v707 = vlaneseq
  %v708 = vshrl.u32 %v707, 7
  %v709 = vsub.s32 0, %v708
  %v710 = vrot.slane %v705, %v709
  %v744 = vunpack.c.l.b16 %v673
  %v745 = vunpack.c.l.b16 %v674
  %v746 = vunpack.c.l.b16 %v675
  %v747 = vunpack.c.l.b16 %v676
  %v748 = vunpack.c.l.b16 %v677
  %v749 = vunpack.c.l.b16 %v678
  %v750 = vunpack.c.l.b16 %v679
  %v751 = vunpack.c.l.b16 %v680
  %v752 = vunpack.c.l.b16 %v681
  %v753 = vunpack.c.l.b16 %v682
  %v754 = vunpack.c.l.b16 %v683
  %v755 = vunpack.c.l.b16 %v684
  %v756 = vunpack.c.l.b16 %v685
  %v757 = vunpack.c.l.b16 %v686
  %v758 = vunpack.c.l.b16 %v687
  %v759 = vunpack.c.l.b16 %v688
  %v760 = vunpack.c.l.b16 %v689
  %v761 = vunpack.c.l.b16 %v690
  %v762 = vunpack.c.l.b16 %v691
  %v763 = vunpack.c.l.b16 %v692
  %v764 = vunpack.c.l.b16 %v693
  %v765 = vunpack.c.l.b16 %v694
  %v766 = vunpack.c.l.b16 %v695
  %v767 = vunpack.c.l.b16 %v696
  %v768 = vunpack.c.l.b16 %v697
  %v769 = vunpack.c.l.b16 %v698
  %v770 = vunpack.c.l.b16 %v699
  %v771 = vunpack.c.l.b16 %v700
  %v772 = vunpack.c.l.b16 %v701
  %v773 = vunpack.c.l.b16 %v702
  %v774 = vunpack.c.l.b16 %v703
  %v775 = vunpack.c.l.b16 %v704
  %v776 = vpack.c.b16 %v745, %v744
  %v777 = vpack.c.b16 %v747, %v746
  %v778 = vpack.c.b16 %v749, %v748
  %v779 = vpack.c.b16 %v751, %v750
  %v780 = vpack.c.b16 %v753, %v752
  %v781 = vpack.c.b16 %v755, %v754
  %v782 = vpack.c.b16 %v757, %v756
  %v783 = vpack.c.b16 %v759, %v758
  %v784 = vpack.c.b16 %v761, %v760
  %v785 = vpack.c.b16 %v763, %v762
  %v786 = vpack.c.b16 %v765, %v764
  %v787 = vpack.c.b16 %v767, %v766
  %v788 = vpack.c.b16 %v769, %v768
  %v789 = vpack.c.b16 %v771, %v770
  %v790 = vpack.c.b16 %v773, %v772
  %v791 = vpack.c.b16 %v775, %v774
  %808 = vmatprep.subr.bf16.mxu0 0
  %809 = vmatpush1.bf16.msra.mxu0 %v783
  %810 = vmatprep.subr.bf16.mxu0 0
  %811 = vmatpush1.bf16.msra.mxu0 %v782
  %812 = vmatprep.subr.bf16.mxu0 0
  %813 = vmatpush1.bf16.msra.mxu0 %v781
  %814 = vmatprep.subr.bf16.mxu0 0
  %815 = vmatpush1.bf16.msra.mxu0 %v780
  %816 = vmatprep.subr.bf16.mxu0 0
  %817 = vmatpush1.bf16.msra.mxu0 %v779
  %818 = vmatprep.subr.bf16.mxu0 0
  %819 = vmatpush1.bf16.msra.mxu0 %v778
  %820 = vmatprep.subr.bf16.mxu0 0
  %821 = vmatpush1.bf16.msra.mxu0 %v777
  %822 = vmatprep.subr.bf16.mxu0 0
  %823 = vmatpush1.bf16.msra.mxu0 %v776
  %824 = vmatprep.subr.bf16.mxu0 0
  %825 = vmatpush2.bf16.msra.mxu0 %v791
  %826 = vmatprep.subr.bf16.mxu0 0
  %827 = vmatpush2.bf16.msra.mxu0 %v790
  %828 = vmatprep.subr.bf16.mxu0 0
  %829 = vmatpush2.bf16.msra.mxu0 %v789
  %830 = vmatprep.subr.bf16.mxu0 0
  %831 = vmatpush2.bf16.msra.mxu0 %v788
  %832 = vmatprep.subr.bf16.mxu0 0
  %833 = vmatpush2.bf16.msra.mxu0 %v787
  %834 = vmatprep.subr.bf16.mxu0 0
  %835 = vmatpush2.bf16.msra.mxu0 %v786
  %836 = vmatprep.subr.bf16.mxu0 0
  %837 = vmatpush2.bf16.msra.mxu0 %v785
  %838 = vmatprep.subr.bf16.mxu0 0
  %839 = vmatpush2.bf16.msra.mxu0 %v784
  %840 = vmatprep.mubr.bf16.mxu0 %v672
  %841 = vmatmul.mubr.bf16.gmra.mxu0 %v671
  %v842 = vpop.f32.mrf.mxu0
  %v843 = vadd.f32 %v710, %v842
  %v844 = vpop.f32.mrf.mxu0
  %v845 = vpop.f32.mrf.mxu0
  %v846 = vpop.f32.mrf.mxu0
  %847 = vdwg.mxu0
  %v848 = vtanh.pop %v843
  %849 = vst [vmem:[%s9] sm:$0xff] %v848
  // Predicated region
  $region38: #{policy_forward.1} parent=0 // pred_check
    _
  $region39: #{policy_forward.1} parent=0 // pred_check_branch
    %851 = sbr.rel (0) target = $region41
  $region40: #{policy_forward.1} parent=0 // pred_region
    _
  $region41: #{policy_forward.1} parent=0 // pred_fallthru
    _
  // Predicated region
  $region42: #{policy_forward.1} parent=0 // pred_check
    _
  $region43: #{policy_forward.1} parent=0 // pred_check_branch
    %853 = sbr.rel (0) target = $region45
  $region44: #{policy_forward.1} parent=0 // pred_region
    _
  $region45: #{policy_forward.1} parent=0 // pred_fallthru
    _

</llo_original>
